<compile_context>
chip_gen: v7x
topology: tpu7x:2x2x1
jax: 0.10.0
libtpu: 0.0.40
codegen_flags: <defaults>
</compile_context>

<pallas_src>
import functools

import jax
import jax.numpy as jnp
from jax.experimental import pallas as pl
from jax.experimental.pallas import tpu as pltpu


def _round_up(x: int, m: int) -> int:
    return ((x + m - 1) // m) * m


def _ffn_body(x_ref, w1_ref, b1_ref, w2_ref, b2_ref, o_ref, acc_ref,
              *, seed, prob_drop: float, tm: int, th: int):
    k = pl.program_id(1)

    # Initialize the accumulator with the second bias once per row tile.
    @pl.when(k == 0)
    def _init():
        acc_ref[...] = jnp.broadcast_to(
            b2_ref[...].astype(jnp.float32), acc_ref.shape)

    # Linear1 (native dtype into the MXU, f32 accumulation) + bias + ReLU.
    h = jnp.dot(x_ref[...], w1_ref[...], preferred_element_type=jnp.float32)
    h = jnp.maximum(h + b1_ref[...].astype(jnp.float32), 0.0)

    # Inverted dropout (training only).  Deterministic per
    # (seed, global row index, global hidden-column index).
    if (seed is not None) and (prob_drop > 0.0):
        row0 = (pl.program_id(0) * tm).astype(jnp.uint32)
        col0 = (pl.program_id(1) * th).astype(jnp.uint32)
        rows = jax.lax.broadcasted_iota(jnp.int32, h.shape, 0).astype(jnp.uint32) + row0
        cols = jax.lax.broadcasted_iota(jnp.int32, h.shape, 1).astype(jnp.uint32) + col0
        z = (rows * jnp.uint32(0x9E3779B1)
             + cols * jnp.uint32(0x85EBCA6B)
             + seed.astype(jnp.uint32) * jnp.uint32(0xC2B2AE35))
        # murmur3-style finalizer (32-bit mix)
        z = z ^ (z >> 16)
        z = z * jnp.uint32(0x7FEB352D)
        z = z ^ (z >> 15)
        z = z * jnp.uint32(0x846CA68B)
        z = z ^ (z >> 16)
        keep_threshold = min(int(round((1.0 - prob_drop) * 2.0 ** 32)), 2 ** 32 - 1)
        keep = z < jnp.uint32(keep_threshold)
        scale = jnp.float32(1.0 / (1.0 - prob_drop)) if prob_drop < 1.0 else jnp.float32(0.0)
        h = jnp.where(keep, h * scale, 0.0)

    # Linear2 partial product, accumulated over hidden-dim tiles in f32.
    acc_ref[...] += jnp.dot(h.astype(w2_ref.dtype), w2_ref[...],
                            preferred_element_type=jnp.float32)

    @pl.when(k == pl.num_programs(1) - 1)
    def _store():
        o_ref[...] = acc_ref[...].astype(o_ref.dtype)


def _ffn_kernel_train(seed_ref, x_ref, w1_ref, b1_ref, w2_ref, b2_ref,
                      o_ref, acc_ref, *, prob_drop: float, tm: int, th: int):
    _ffn_body(x_ref, w1_ref, b1_ref, w2_ref, b2_ref, o_ref, acc_ref,
              seed=seed_ref[0], prob_drop=prob_drop, tm=tm, th=th)


def _ffn_kernel_eval(x_ref, w1_ref, b1_ref, w2_ref, b2_ref, o_ref, acc_ref):
    _ffn_body(x_ref, w1_ref, b1_ref, w2_ref, b2_ref, o_ref, acc_ref,
              seed=None, prob_drop=0.0, tm=0, th=0)


def position_wise_feed_forward(x, w1, b1, w2, b2, *,
                               prob_drop: float = 0.1,
                               training: bool = False,
                               seed: int = 0,
                               tm: int = 256,
                               th: int | None = None,
                               vmem_limit_bytes: int | None = None):
    """FFN forward.

    x:  [B, S, d_model]
    w1: [d_model, hidden]   (pre-transposed: in_features x out_features)
    b1: [hidden]
    w2: [hidden, d_model]
    b2: [d_model]
    th: optional hidden-dim tile (multiple of 128). None => full hidden
        resident (best on v5e/v6e); set e.g. 512-1024 on v7x for big FFNs.
    """
    B, S, D = x.shape
    H = w1.shape[1]
    N = B * S

    # Row tile: multiple of 8 sublanes, clamped for tiny inputs.
    tm = max(8, min(tm, _round_up(N, 8)))
    N_pad = _round_up(N, tm)

    # Lane-dense feature padding (last dims multiples of 128).
    D_pad = _round_up(D, 128)
    if th is None:
        H_pad = _round_up(H, 128)
        th = H_pad
    else:
        th = max(128, _round_up(th, 128))
        H_pad = _round_up(H, th)

    # Pad operands (zero padding is exact: padded rows/cols contribute 0).
    x2 = jnp.pad(x.reshape(N, D), ((0, N_pad - N), (0, D_pad - D)))
    w1p = jnp.pad(w1, ((0, D_pad - D), (0, H_pad - H)))
    b1p = jnp.pad(b1, (0, H_pad - H)).reshape(1, H_pad)
    w2p = jnp.pad(w2, ((0, H_pad - H), (0, D_pad - D)))
    b2p = jnp.pad(b2, (0, D_pad - D)).reshape(1, D_pad)

    grid = (N_pad // tm, H_pad // th)

    in_specs = [
        pl.BlockSpec((tm, D_pad), lambda i, k, *_: (i, 0)),   # x row tile
        pl.BlockSpec((D_pad, th), lambda i, k, *_: (0, k)),   # W1 column slab
        pl.BlockSpec((1, th),     lambda i, k, *_: (0, k)),   # b1 slab
        pl.BlockSpec((th, D_pad), lambda i, k, *_: (k, 0)),   # W2 row slab
        pl.BlockSpec((1, D_pad),  lambda i, k, *_: (0, 0)),   # b2
    ]
    out_spec = pl.BlockSpec((tm, D_pad), lambda i, k, *_: (i, 0))
    scratch = [pltpu.VMEM((tm, D_pad), jnp.float32)]

    compiler_params = pltpu.CompilerParams(
        dimension_semantics=("parallel", "arbitrary"),
        vmem_limit_bytes=vmem_limit_bytes)

    use_dropout = training and prob_drop > 0.0
    if use_dropout:
        kernel = functools.partial(_ffn_kernel_train,
                                   prob_drop=float(prob_drop), tm=tm, th=th)
        grid_spec = pltpu.PrefetchScalarGridSpec(
            num_scalar_prefetch=1, grid=grid,
            in_specs=in_specs, out_specs=out_spec, scratch_shapes=scratch)
        args = (jnp.array([seed], jnp.int32), x2, w1p, b1p, w2p, b2p)
    else:
        kernel = _ffn_kernel_eval
        grid_spec = pltpu.PrefetchScalarGridSpec(
            num_scalar_prefetch=0, grid=grid,
            in_specs=in_specs, out_specs=out_spec, scratch_shapes=scratch)
        args = (x2, w1p, b1p, w2p, b2p)

    out2 = pl.pallas_call(
        kernel,
        out_shape=jax.ShapeDtypeStruct((N_pad, D_pad), x.dtype),
        grid_spec=grid_spec,
        compiler_params=compiler_params,
    )(*args)

    return out2[:N, :D].reshape(B, S, D)


def _init_params(key, d_model, hidden):
    """Deterministic init matching nn.Linear's U(-1/sqrt(fan_in), 1/sqrt(fan_in))."""
    k1, k2, k3, k4 = jax.random.split(key, 4)
    lim1 = 1.0 / (d_model ** 0.5)
    lim2 = 1.0 / (hidden ** 0.5)
    # Stored pre-transposed: [in_features, out_features]
    w1 = jax.random.uniform(k1, (d_model, hidden), jnp.float32, -lim1, lim1)
    b1 = jax.random.uniform(k2, (hidden,), jnp.float32, -lim1, lim1)
    w2 = jax.random.uniform(k3, (hidden, d_model), jnp.float32, -lim2, lim2)
    b2 = jax.random.uniform(k4, (d_model,), jnp.float32, -lim2, lim2)
    return w1, b1, w2, b2


if __name__ == "__main__":
    B, S, D_MODEL, HIDDEN = 2, 8, 32, 64

    key = jax.random.PRNGKey(0)
    kx, kp = jax.random.split(key)
    x = jax.random.normal(kx, (B, S, D_MODEL), jnp.float32)
    w1, b1, w2, b2 = _init_params(kp, D_MODEL, HIDDEN)

    # Eval-mode forward (dropout = identity): check against pure-JAX reference.
    out = position_wise_feed_forward(x, w1, b1, w2, b2,
                                     prob_drop=0.1, training=False)
    out = jax.block_until_ready(out)

    ref = jnp.maximum(x @ w1 + b1, 0.0) @ w2 + b2
    assert out.shape == (B, S, D_MODEL)
    assert jnp.allclose(out, ref, atol=1e-5, rtol=1e-5), "mismatch vs reference"

    # Train-mode forward (dropout active, deterministic hash PRNG).
    out_train = position_wise_feed_forward(x, w1, b1, w2, b2,
                                           prob_drop=0.1, training=True,
                                           seed=123)
    out_train = jax.block_until_ready(out_train)
    assert out_train.shape == (B, S, D_MODEL)
    assert bool(jnp.isfinite(out_train).all())

    print("KERNEL_OK")
</pallas_src>

<mosaic_0001>
module attributes {stable_mosaic.version = 11 : i64} {
  func.func @_ffn_kernel_eval(%arg0: i32, %arg1: i32, %arg2: memref<16x128xf32, #tpu.memory_space<vmem>>, %arg3: memref<128x128xf32, #tpu.memory_space<vmem>>, %arg4: memref<1x128xf32, #tpu.memory_space<vmem>>, %arg5: memref<128x128xf32, #tpu.memory_space<vmem>>, %arg6: memref<1x128xf32, #tpu.memory_space<vmem>>, %arg7: memref<16x128xf32, #tpu.memory_space<vmem>>, %arg8: memref<16x128xf32, #tpu.memory_space<vmem>>) attributes {dimension_semantics = [#tpu.dimension_semantics<parallel>, #tpu.dimension_semantics<arbitrary>], iteration_bounds = array<i64: 1, 1>, scalar_prefetch = 0 : i64, scratch_operands = 1 : i64, tpu.core_type = #tpu.core_type<tc>, window_params = [{transform_indices = @transform_0, window_bounds = array<i64: 16, 128>}, {transform_indices = @transform_1, window_bounds = array<i64: 128, 128>}, {transform_indices = @transform_2, window_bounds = array<i64: 1, 128>}, {transform_indices = @transform_3, window_bounds = array<i64: 128, 128>}, {pipeline_mode = #tpu.pipeline_mode<synchronous>, transform_indices = @transform_4, window_bounds = array<i64: 1, 128>}, {transform_indices = @transform_5, window_bounds = array<i64: 16, 128>}]} {
    %c0_i32 = arith.constant 0 : i32
    %0 = arith.cmpi eq, %arg1, %c0_i32 : i32
    %1 = arith.extui %0 : i1 to i32
    %c0_i32_0 = arith.constant 0 : i32
    %2 = arith.cmpi ne, %1, %c0_i32_0 : i32
    scf.if %2 {
      %c0_16 = arith.constant 0 : index
      %c0_17 = arith.constant 0 : index
      %19 = vector.load %arg6[%c0_16, %c0_17] : memref<1x128xf32, #tpu.memory_space<vmem>>, vector<1x128xf32>
      %20 = vector.shape_cast %19 : vector<1x128xf32> to vector<1x128xf32>
      %21 = vector.broadcast %20 : vector<1x128xf32> to vector<16x128xf32>
      %c0_18 = arith.constant 0 : index
      %c0_19 = arith.constant 0 : index
      %22 = vector.load %arg8[%c0_18, %c0_19] : memref<16x128xf32, #tpu.memory_space<vmem>>, vector<16x128xf32>
      tpu.vector_store %arg8[%c0_18, %c0_19], %21 {strides = array<i32>} : memref<16x128xf32, #tpu.memory_space<vmem>>, vector<16x128xf32>,
    } else {
    }
    %c0 = arith.constant 0 : index
    %c0_1 = arith.constant 0 : index
    %3 = vector.load %arg2[%c0, %c0_1] : memref<16x128xf32, #tpu.memory_space<vmem>>, vector<16x128xf32>
    %c0_2 = arith.constant 0 : index
    %c0_3 = arith.constant 0 : index
    %4 = vector.load %arg3[%c0_2, %c0_3] : memref<128x128xf32, #tpu.memory_space<vmem>>, vector<128x128xf32>
    %cst = arith.constant dense<0.000000e+00> : vector<16x128xf32>
    %5 = tpu.matmul %3, %4, %cst {dimension_numbers = #tpu.dot_dimension_numbers<[1], [0], [0], [1], [0, 0, 1, 1], [], []>} : vector<16x128xf32>, vector<128x128xf32>, vector<16x128xf32> -> vector<16x128xf32>
    %c0_4 = arith.constant 0 : index
    %c0_5 = arith.constant 0 : index
    %6 = vector.load %arg4[%c0_4, %c0_5] : memref<1x128xf32, #tpu.memory_space<vmem>>, vector<1x128xf32>
    %7 = vector.broadcast %6 : vector<1x128xf32> to vector<16x128xf32>
    %8 = arith.addf %5, %7 : vector<16x128xf32>
    %cst_6 = arith.constant 0.000000e+00 : f32
    %9 = vector.broadcast %cst_6 : f32 to vector<16x128xf32>
    %10 = arith.maximumf %8, %9 : vector<16x128xf32>
    %c0_7 = arith.constant 0 : index
    %c0_8 = arith.constant 0 : index
    %11 = vector.load %arg8[%c0_7, %c0_8] : memref<16x128xf32, #tpu.memory_space<vmem>>, vector<16x128xf32>
    %c0_9 = arith.constant 0 : index
    %c0_10 = arith.constant 0 : index
    %12 = vector.load %arg5[%c0_9, %c0_10] : memref<128x128xf32, #tpu.memory_space<vmem>>, vector<128x128xf32>
    %cst_11 = arith.constant dense<0.000000e+00> : vector<16x128xf32>
    %13 = tpu.matmul %10, %12, %cst_11 {dimension_numbers = #tpu.dot_dimension_numbers<[1], [0], [0], [1], [0, 0, 1, 1], [], []>} : vector<16x128xf32>, vector<128x128xf32>, vector<16x128xf32> -> vector<16x128xf32>
    %14 = arith.addf %11, %13 : vector<16x128xf32>
    %c0_12 = arith.constant 0 : index
    %c0_13 = arith.constant 0 : index
    %15 = vector.load %arg8[%c0_12, %c0_13] : memref<16x128xf32, #tpu.memory_space<vmem>>, vector<16x128xf32>
    tpu.vector_store %arg8[%c0_12, %c0_13], %14 {strides = array<i32>} : memref<16x128xf32, #tpu.memory_space<vmem>>, vector<16x128xf32>,
    %c0_i32_14 = arith.constant 0 : i32
    %16 = arith.cmpi eq, %arg1, %c0_i32_14 : i32
    %17 = arith.extui %16 : i1 to i32
    %c0_i32_15 = arith.constant 0 : i32
    %18 = arith.cmpi ne, %17, %c0_i32_15 : i32
    scf.if %18 {
      %c0_16 = arith.constant 0 : index
      %c0_17 = arith.constant 0 : index
      %19 = vector.load %arg8[%c0_16, %c0_17] : memref<16x128xf32, #tpu.memory_space<vmem>>, vector<16x128xf32>
      %c0_18 = arith.constant 0 : index
      %c0_19 = arith.constant 0 : index
      %20 = vector.load %arg7[%c0_18, %c0_19] : memref<16x128xf32, #tpu.memory_space<vmem>>, vector<16x128xf32>
      tpu.vector_store %arg7[%c0_18, %c0_19], %19 {strides = array<i32>} : memref<16x128xf32, #tpu.memory_space<vmem>>, vector<16x128xf32>,
    } else {
    }
    return
  }
  func.func @transform_0(%arg0: i32, %arg1: i32) -> (i32, i32) {
    %c0_i32 = arith.constant 0 : i32
    %c0_i32_0 = arith.constant 0 : i32
    return %arg0, %c0_i32 : i32, i32
  }
  func.func @transform_1(%arg0: i32, %arg1: i32) -> (i32, i32) {
    %c0_i32 = arith.constant 0 : i32
    %c0_i32_0 = arith.constant 0 : i32
    return %c0_i32, %arg1 : i32, i32
  }
  func.func @transform_2(%arg0: i32, %arg1: i32) -> (i32, i32) {
    %c0_i32 = arith.constant 0 : i32
    %c0_i32_0 = arith.constant 0 : i32
    return %c0_i32, %arg1 : i32, i32
  }
  func.func @transform_3(%arg0: i32, %arg1: i32) -> (i32, i32) {
    %c0_i32 = arith.constant 0 : i32
    %c0_i32_0 = arith.constant 0 : i32
    return %arg1, %c0_i32 : i32, i32
  }
  func.func @transform_4(%arg0: i32, %arg1: i32) -> (i32, i32) {
    %c0_i32 = arith.constant 0 : i32
    %c0_i32_0 = arith.constant 0 : i32
    %c0_i32_1 = arith.constant 0 : i32
    return %c0_i32, %c0_i32_0 : i32, i32
  }
  func.func @transform_5(%arg0: i32, %arg1: i32) -> (i32, i32) {
    %c0_i32 = arith.constant 0 : i32
    %c0_i32_0 = arith.constant 0 : i32
    return %arg0, %c0_i32 : i32, i32
  }
}

</mosaic_0001>

<llo_original>
// kernel: tpu_custom_call.1
$region0: #{tpu_custom_call.1}
  #allocation0 [shape = 'u32[]', space=smem, size = 0x4, offset = 0x4, fixed_abs, tag = 'smem constant byte address 0x4 - core index']
  #allocation1 [shape = 'u32[144,128]{1,0:T(1,128)}', space=vmem, size = 0x12000, scoped, tag = 'internal scratch']
  #allocation2 [shape = 'f32[16,128]{1,0:T(8,128)}', space=vmem, size = 0x2000, scoped, tag = 'scratch operand']
  %s0 = inlined_call_operand.hbm [shape: f32[16,128], index: 0, kind: input, shape index: {}]
  %s1 = inlined_call_operand.hbm [shape: f32[128,128], index: 1, kind: input, shape index: {}]
  %s2 = inlined_call_operand.vmem [shape: f32[1,128], index: 2, kind: input, shape index: {}]
  %s3 = inlined_call_operand.hbm [shape: f32[128,128], index: 3, kind: input, shape index: {}]
  %s4 = inlined_call_operand.vmem [shape: f32[1,128], index: 4, kind: input, shape index: {}]
  %s5 = inlined_call_operand.hbm [shape: f32[16,128], index: 5, kind: output, shape index: {}]
  %s6 = sld [smem:[#allocation0]]
  $region50: #{tpu_custom_call.1} parent=0
    _
  %s8 = ssub.s32 1, %s6
  %s9 = scalar_select 0, %s8, %s6
  $region1: #{tpu_custom_call.1} parent=0
    #allocation3 [shape = 'u8[8192]{0}', space=vmem, size = 0x2000, scoped, tag = 'input window, operand 0, single buffered']
    #allocation4 [shape = 's32[1]{0}', space=sflag, size = 0x4, scoped, tag = 'scoped memory for tpu_custom_call.1']
    #allocation5 [shape = 's32[1]{0}', space=sflag, size = 0x4, scoped, tag = 'scoped memory for tpu_custom_call.1']
    #allocation6 [shape = 'u8[65536]{0}', space=vmem, size = 0x10000, scoped, tag = 'input window, operand 1, single buffered']
    #allocation7 [shape = 's32[1]{0}', space=sflag, size = 0x4, scoped, tag = 'scoped memory for tpu_custom_call.1']
    #allocation8 [shape = 'u8[65536]{0}', space=vmem, size = 0x10000, scoped, tag = 'input window, operand 3, single buffered']
    #allocation9 [shape = 'u8[8192]{0}', space=vmem, size = 0x2000, scoped, tag = 'output window, operand 0, single buffered']
    %10 = vsyncpa [#allocation4], 0
    %11 = vsyncpa [#allocation7], 0
    %12 = vsyncpa [#allocation5], 0
    // Predicated region
    $region2: #{tpu_custom_call.1} parent=1 // pred_check
      _
    $region3: #{tpu_custom_call.1} parent=1 // pred_check_branch
      %14 = sbr.rel (0) target = $region5
    $region4: #{tpu_custom_call.1} parent=1 // pred_region
      %s16 = ssub.s32 256, 256
      %17 = vsyncadd [#allocation4], %s16
      %s18 = sshll.u32 [#allocation3], 4
      %s19 = int_to_ptr.vmem [resolvable:$true] %s18
      %24 = dma.hbm_to_vmem [thread:$0]  %s0, 256, %s19, [#allocation4], 128, 128, 8
    $region5: #{tpu_custom_call.1} parent=1 // pred_fallthru
      _
    // Predicated region
    $region6: #{tpu_custom_call.1} parent=1 // pred_check
      _
    $region7: #{tpu_custom_call.1} parent=1 // pred_check_branch
      %26 = sbr.rel (0) target = $region9
    $region8: #{tpu_custom_call.1} parent=1 // pred_region
      %s28 = ssub.s32 2048, 2048
      %29 = vsyncadd [#allocation7], %s28
      %s30 = sshll.u32 [#allocation6], 4
      %s31 = int_to_ptr.vmem [resolvable:$true] %s30
      %36 = dma.hbm_to_vmem [thread:$0]  %s1, 2048, %s31, [#allocation7], 128, 128, 8
    $region9: #{tpu_custom_call.1} parent=1 // pred_fallthru
      _
    // Predicated region
    $region10: #{tpu_custom_call.1} parent=1 // pred_check
      _
    $region11: #{tpu_custom_call.1} parent=1 // pred_check_branch
      %38 = sbr.rel (0) target = $region13
    $region12: #{tpu_custom_call.1} parent=1 // pred_region
      _
    $region13: #{tpu_custom_call.1} parent=1 // pred_fallthru
      _
    // Predicated region
    $region14: #{tpu_custom_call.1} parent=1 // pred_check
      _
    $region15: #{tpu_custom_call.1} parent=1 // pred_check_branch
      %40 = sbr.rel (0) target = $region17
    $region16: #{tpu_custom_call.1} parent=1 // pred_region
      %s42 = ssub.s32 2048, 2048
      %43 = vsyncadd [#allocation7], %s42
      %s44 = sshll.u32 [#allocation8], 4
      %s45 = int_to_ptr.vmem [resolvable:$true] %s44
      %50 = dma.hbm_to_vmem [thread:$0]  %s3, 2048, %s45, [#allocation7], 128, 128, 8
    $region17: #{tpu_custom_call.1} parent=1 // pred_fallthru
      _
    // Predicated region
    $region18: #{tpu_custom_call.1} parent=1 // pred_check
      _
    $region19: #{tpu_custom_call.1} parent=1 // pred_check_branch
      %52 = sbr.rel (0) target = $region21
    $region20: #{tpu_custom_call.1} parent=1 // pred_region
      _
    $region21: #{tpu_custom_call.1} parent=1 // pred_fallthru
      _
    // Predicated region
    $region22: #{tpu_custom_call.1} parent=1 // pred_check
      _
    $region23: #{tpu_custom_call.1} parent=1 // pred_check_branch
      %54 = sbr.rel (0) target = $region25
    $region24: #{tpu_custom_call.1} parent=1 // pred_region
      %55 = dma.done [#allocation4], 256
    $region25: #{tpu_custom_call.1} parent=1 // pred_fallthru
      _
    // Predicated region
    $region26: #{tpu_custom_call.1} parent=1 // pred_check
      _
    $region27: #{tpu_custom_call.1} parent=1 // pred_check_branch
      %57 = sbr.rel (0) target = $region29
    $region28: #{tpu_custom_call.1} parent=1 // pred_region
      %58 = dma.done [#allocation7], 2048
    $region29: #{tpu_custom_call.1} parent=1 // pred_fallthru
      _
    // Predicated region
    $region30: #{tpu_custom_call.1} parent=1 // pred_check
      _
    $region31: #{tpu_custom_call.1} parent=1 // pred_check_branch
      %60 = sbr.rel (0) target = $region33
    $region32: #{tpu_custom_call.1} parent=1 // pred_region
      %61 = dma.done [#allocation7], 2048
    $region33: #{tpu_custom_call.1} parent=1 // pred_fallthru
      _
    %p62 = scmp.eq.s32.totalorder 0, 0
    // Predicated region
    $region34: #{tpu_custom_call.1} parent=1 // pred_check
      %p63 = pneg %p62
    $region35: #{tpu_custom_call.1} parent=1 // pred_check_branch
      %65 = sbr.rel (%p63) target = $region37
    $region36: #{tpu_custom_call.1} parent=1 // pred_region
      %v66 = vld [vmem:[%s4] sm:$0x1]
      %v68 = vlaneseq
      %v69 = vshrl.u32 %v68, 7
      %v70 = vsub.s32 0, %v69
      %v71 = vrot.slane %v66, %v70
      %73 = vst [vmem:[#allocation2] sm:$0xff] %v71
      %74 = vst [vmem:[#allocation2 + $0x8] sm:$0xff] %v71
    $region37: #{tpu_custom_call.1} parent=1 // pred_fallthru
      _
    %v75 = vld [vmem:[#allocation3] sm:$0xff]
    %v76 = vld [vmem:[#allocation3 + $0x8] sm:$0xff]
    %v77 = vld [vmem:[#allocation6] sm:$0xff]
    %v78 = vld [vmem:[#allocation6 + $0x8] sm:$0xff]
    %v79 = vld [vmem:[#allocation6 + $0x10] sm:$0xff]
    %v80 = vld [vmem:[#allocation6 + $0x18] sm:$0xff]
    %v81 = vld [vmem:[#allocation6 + $0x20] sm:$0xff]
    %v82 = vld [vmem:[#allocation6 + $0x28] sm:$0xff]
    %v83 = vld [vmem:[#allocation6 + $0x30] sm:$0xff]
    %v84 = vld [vmem:[#allocation6 + $0x38] sm:$0xff]
    %v85 = vld [vmem:[#allocation6 + $0x40] sm:$0xff]
    %v86 = vld [vmem:[#allocation6 + $0x48] sm:$0xff]
    %v87 = vld [vmem:[#allocation6 + $0x50] sm:$0xff]
    %v88 = vld [vmem:[#allocation6 + $0x58] sm:$0xff]
    %v89 = vld [vmem:[#allocation6 + $0x60] sm:$0xff]
    %v90 = vld [vmem:[#allocation6 + $0x68] sm:$0xff]
    %v91 = vld [vmem:[#allocation6 + $0x70] sm:$0xff]
    %v92 = vld [vmem:[#allocation6 + $0x78] sm:$0xff]
    %v93 = vld [vmem:[%s2] sm:$0x1]
    %v95 = vlaneseq
    %v96 = vshrl.u32 %v95, 7
    %v97 = vsub.s32 0, %v96
    %v98 = vrot.slane %v93, %v97
    %100 = vmatprep.subr.mxu0 0.0
    %101 = vmatpush1.msra.mxu0 %v77
    %102 = vmatprep.subr.mxu0 0.0
    %103 = vmatpush1.msra.mxu0 %v78
    %104 = vmatprep.subr.mxu0 0.0
    %105 = vmatpush1.msra.mxu0 %v79
    %106 = vmatprep.subr.mxu0 0.0
    %107 = vmatpush1.msra.mxu0 %v80
    %108 = vmatprep.subr.mxu0 0.0
    %109 = vmatpush1.msra.mxu0 %v81
    %110 = vmatprep.subr.mxu0 0.0
    %111 = vmatpush1.msra.mxu0 %v82
    %112 = vmatprep.subr.mxu0 0.0
    %113 = vmatpush1.msra.mxu0 %v83
    %114 = vmatprep.subr.mxu0 0.0
    %115 = vmatpush1.msra.mxu0 %v84
    %116 = vmatprep.subr.mxu0 0.0
    %117 = vmatpush1.msra.mxu0 %v85
    %118 = vmatprep.subr.mxu0 0.0
    %119 = vmatpush1.msra.mxu0 %v86
    %120 = vmatprep.subr.mxu0 0.0
    %121 = vmatpush1.msra.mxu0 %v87
    %122 = vmatprep.subr.mxu0 0.0
    %123 = vmatpush1.msra.mxu0 %v88
    %124 = vmatprep.subr.mxu0 0.0
    %125 = vmatpush1.msra.mxu0 %v89
    %126 = vmatprep.subr.mxu0 0.0
    %127 = vmatpush1.msra.mxu0 %v90
    %128 = vmatprep.subr.mxu0 0.0
    %129 = vmatpush1.msra.mxu0 %v91
    %130 = vmatprep.subr.mxu0 0.0
    %131 = vmatpush1.msra.mxu0 %v92
    %132 = vmatprep.subr.mxu0 0.0
    %133 = vmatpush1.msra.mxu0 0.0
    %134 = vmatprep.subr.mxu0 0.0
    %135 = vmatpush1.msra.mxu0 0.0
    %136 = vmatprep.subr.mxu0 0.0
    %137 = vmatpush1.msra.mxu0 0.0
    %138 = vmatprep.subr.mxu0 0.0
    %139 = vmatpush1.msra.mxu0 0.0
    %140 = vmatprep.subr.mxu0 0.0
    %141 = vmatpush1.msra.mxu0 0.0
    %142 = vmatprep.subr.mxu0 0.0
    %143 = vmatpush1.msra.mxu0 0.0
    %144 = vmatprep.subr.mxu0 0.0
    %145 = vmatpush1.msra.mxu0 0.0
    %146 = vmatprep.subr.mxu0 0.0
    %147 = vmatpush1.msra.mxu0 0.0
    %148 = vmatprep.subr.mxu0 0.0
    %149 = vmatpush1.msra.mxu0 0.0
    %150 = vmatprep.subr.mxu0 0.0
    %151 = vmatpush1.msra.mxu0 0.0
    %152 = vmatprep.subr.mxu0 0.0
    %153 = vmatpush1.msra.mxu0 0.0
    %154 = vmatprep.subr.mxu0 0.0
    %155 = vmatpush1.msra.mxu0 0.0
    %156 = vmatprep.subr.mxu0 0.0
    %157 = vmatpush1.msra.mxu0 0.0
    %158 = vmatprep.subr.mxu0 0.0
    %159 = vmatpush1.msra.mxu0 0.0
    %160 = vmatprep.subr.mxu0 0.0
    %161 = vmatpush1.msra.mxu0 0.0
    %162 = vmatprep.subr.mxu0 0.0
    %163 = vmatpush1.msra.mxu0 0.0
    %164 = vmatprep.mubr.f32.mxu0 0.0
    %165 = vmatmul.mubr.f32.gmra.mrb[0].mxu0 %v75
    %v166 = vpop.f32.mrb[0].mxu0
    %v167 = vadd.f32 %v98, %v166
    %v168 = vpop.f32.mrb[0].mxu0
    %169 = vmatprep.mubr.f32.mxu0 0.0
    %170 = vmatmul.mubr.f32.gmra.mrb[0].mxu0 %v76
    %v171 = vpop.f32.mrb[0].mxu0
    %v172 = vadd.f32 %v98, %v171
    %v173 = vpop.f32.mrb[0].mxu0
    %174 = vdwg.mxu0
    %v175 = vmax.f32 %v167, 0.0
    %v176 = vmax.f32 %v172, 0.0
    %v177 = vld [vmem:[#allocation2] sm:$0xff]
    %v178 = vld [vmem:[#allocation2 + $0x8] sm:$0xff]
    %v179 = vld [vmem:[#allocation8] sm:$0xff]
    %v180 = vld [vmem:[#allocation8 + $0x8] sm:$0xff]
    %v181 = vld [vmem:[#allocation8 + $0x10] sm:$0xff]
    %v182 = vld [vmem:[#allocation8 + $0x18] sm:$0xff]
    %v183 = vld [vmem:[#allocation8 + $0x20] sm:$0xff]
    %v184 = vld [vmem:[#allocation8 + $0x28] sm:$0xff]
    %v185 = vld [vmem:[#allocation8 + $0x30] sm:$0xff]
    %v186 = vld [vmem:[#allocation8 + $0x38] sm:$0xff]
    %v187 = vld [vmem:[#allocation8 + $0x40] sm:$0xff]
    %v188 = vld [vmem:[#allocation8 + $0x48] sm:$0xff]
    %v189 = vld [vmem:[#allocation8 + $0x50] sm:$0xff]
    %v190 = vld [vmem:[#allocation8 + $0x58] sm:$0xff]
    %v191 = vld [vmem:[#allocation8 + $0x60] sm:$0xff]
    %v192 = vld [vmem:[#allocation8 + $0x68] sm:$0xff]
    %v193 = vld [vmem:[#allocation8 + $0x70] sm:$0xff]
    %v194 = vld [vmem:[#allocation8 + $0x78] sm:$0xff]
    %195 = vmatprep.subr.mxu0 0.0
    %196 = vmatpush1.msra.mxu0 %v179
    %197 = vmatprep.subr.mxu0 0.0
    %198 = vmatpush1.msra.mxu0 %v180
    %199 = vmatprep.subr.mxu0 0.0
    %200 = vmatpush1.msra.mxu0 %v181
    %201 = vmatprep.subr.mxu0 0.0
    %202 = vmatpush1.msra.mxu0 %v182
    %203 = vmatprep.subr.mxu0 0.0
    %204 = vmatpush1.msra.mxu0 %v183
    %205 = vmatprep.subr.mxu0 0.0
    %206 = vmatpush1.msra.mxu0 %v184
    %207 = vmatprep.subr.mxu0 0.0
    %208 = vmatpush1.msra.mxu0 %v185
    %209 = vmatprep.subr.mxu0 0.0
    %210 = vmatpush1.msra.mxu0 %v186
    %211 = vmatprep.subr.mxu0 0.0
    %212 = vmatpush1.msra.mxu0 %v187
    %213 = vmatprep.subr.mxu0 0.0
    %214 = vmatpush1.msra.mxu0 %v188
    %215 = vmatprep.subr.mxu0 0.0
    %216 = vmatpush1.msra.mxu0 %v189
    %217 = vmatprep.subr.mxu0 0.0
    %218 = vmatpush1.msra.mxu0 %v190
    %219 = vmatprep.subr.mxu0 0.0
    %220 = vmatpush1.msra.mxu0 %v191
    %221 = vmatprep.subr.mxu0 0.0
    %222 = vmatpush1.msra.mxu0 %v192
    %223 = vmatprep.subr.mxu0 0.0
    %224 = vmatpush1.msra.mxu0 %v193
    %225 = vmatprep.subr.mxu0 0.0
    %226 = vmatpush1.msra.mxu0 %v194
    %227 = vmatprep.subr.mxu0 0.0
    %228 = vmatpush1.msra.mxu0 0.0
    %229 = vmatprep.subr.mxu0 0.0
    %230 = vmatpush1.msra.mxu0 0.0
    %231 = vmatprep.subr.mxu0 0.0
    %232 = vmatpush1.msra.mxu0 0.0
    %233 = vmatprep.subr.mxu0 0.0
    %234 = vmatpush1.msra.mxu0 0.0
    %235 = vmatprep.subr.mxu0 0.0
    %236 = vmatpush1.msra.mxu0 0.0
    %237 = vmatprep.subr.mxu0 0.0
    %238 = vmatpush1.msra.mxu0 0.0
    %239 = vmatprep.subr.mxu0 0.0
    %240 = vmatpush1.msra.mxu0 0.0
    %241 = vmatprep.subr.mxu0 0.0
    %242 = vmatpush1.msra.mxu0 0.0
    %243 = vmatprep.subr.mxu0 0.0
    %244 = vmatpush1.msra.mxu0 0.0
    %245 = vmatprep.subr.mxu0 0.0
    %246 = vmatpush1.msra.mxu0 0.0
    %247 = vmatprep.subr.mxu0 0.0
    %248 = vmatpush1.msra.mxu0 0.0
    %249 = vmatprep.subr.mxu0 0.0
    %250 = vmatpush1.msra.mxu0 0.0
    %251 = vmatprep.subr.mxu0 0.0
    %252 = vmatpush1.msra.mxu0 0.0
    %253 = vmatprep.subr.mxu0 0.0
    %254 = vmatpush1.msra.mxu0 0.0
    %255 = vmatprep.subr.mxu0 0.0
    %256 = vmatpush1.msra.mxu0 0.0
    %257 = vmatprep.subr.mxu0 0.0
    %258 = vmatpush1.msra.mxu0 0.0
    %259 = vmatprep.mubr.f32.mxu0 0.0
    %260 = vmatmul.mubr.f32.gmra.mrb[0].mxu0 %v175
    %v261 = vpop.f32.mrb[0].mxu0
    %v262 = vadd.f32 0.0, %v261
    %v263 = vpop.f32.mrb[0].mxu0
    %264 = vmatprep.mubr.f32.mxu0 0.0
    %265 = vmatmul.mubr.f32.gmra.mrb[0].mxu0 %v176
    %v266 = vpop.f32.mrb[0].mxu0
    %v267 = vadd.f32 0.0, %v266
    %v268 = vpop.f32.mrb[0].mxu0
    %269 = vdwg.mxu0
    %v270 = vadd.f32 %v177, %v262
    %v271 = vadd.f32 %v178, %v267
    %272 = vst [vmem:[#allocation2] sm:$0xff] %v270
    %273 = vst [vmem:[#allocation2 + $0x8] sm:$0xff] %v271
    // Predicated region
    $region38: #{tpu_custom_call.1} parent=1 // pred_check
      %p274 = pneg %p62
    $region39: #{tpu_custom_call.1} parent=1 // pred_check_branch
      %276 = sbr.rel (%p274) target = $region41
    $region40: #{tpu_custom_call.1} parent=1 // pred_region
      %v277 = vld [vmem:[#allocation2] sm:$0xff]
      %v278 = vld [vmem:[#allocation2 + $0x8] sm:$0xff]
      %279 = vst [vmem:[#allocation9] sm:$0xff] %v277
      %280 = vst [vmem:[#allocation9 + $0x8] sm:$0xff] %v278
    $region41: #{tpu_custom_call.1} parent=1 // pred_fallthru
      _
    // Predicated region
    $region42: #{tpu_custom_call.1} parent=1 // pred_check
      _
    $region43: #{tpu_custom_call.1} parent=1 // pred_check_branch
      %282 = sbr.rel (0) target = $region45
    $region44: #{tpu_custom_call.1} parent=1 // pred_region
      %s284 = ssub.s32 256, 256
      %285 = vsyncadd [#allocation5], %s284
      %s286 = sshll.u32 [#allocation9], 4
      %s287 = int_to_ptr.vmem [resolvable:$true] %s286
      %292 = dma.vmem_to_hbm [thread:$0]  %s287, 256, %s5, [#allocation5], 128, 128, 8
    $region45: #{tpu_custom_call.1} parent=1 // pred_fallthru
      _
    // Predicated region
    $region46: #{tpu_custom_call.1} parent=1 // pred_check
      _
    $region47: #{tpu_custom_call.1} parent=1 // pred_check_branch
      %294 = sbr.rel (0) target = $region49
    $region48: #{tpu_custom_call.1} parent=1 // pred_region
      %295 = dma.done [#allocation5], 256
    $region49: #{tpu_custom_call.1} parent=1 // pred_fallthru
      _
    %296 = vsyncpa [#allocation4], 1
    %297 = vsyncpa [#allocation7], 1
    %298 = vsyncpa [#allocation5], 1

</llo_original>
